<compile_context>
chip_gen: v5e
topology: v5e:2x2
jax: 0.10.0
libtpu: 0.0.40
codegen_flags: <defaults>
</compile_context>

<pallas_src>
import functools
import math

import jax
import jax.numpy as jnp
from jax.experimental import pallas as pl
from jax.experimental.pallas import tpu as pltpu


def _dc_kernel(l_ref, w1_ref, r2_ref, mask_ref, pred_ref, usk2_ref,
               img_ref, ksp_ref, cdcol_ref, pqrow_ref, *, bb, h, w):
    # Constant operands (single-buffered whole-array VMEM refs).
    L = l_ref[...]       # (2H, H)  rs * [C_H ; S_H]
    W1 = w1_ref[...]     # (W, 2W)  rs * [C_W | -S_W]
    R2 = r2_ref[...]     # (2W, W)  rs * [C_W ; -S_W]
    m = mask_ref[...]    # (H, W)
    w2 = 2 * w

    # ---- stage 1: forward right-multiply, row-batched over the block ----
    x_all = pred_ref[...].reshape(bb * h, w)                      # free reshape
    cd_all = jnp.dot(x_all, W1, preferred_element_type=jnp.float32)  # (BB*H, 2W)
    # per image b: cd[b] = [ rs*x C_W | -rs*x S_W ]

    # Row -> column pivot (the only extra copy in the kernel); turns the two
    # left-multiplies into single full-width pushes instead of BB small ones.
    if bb == 1:
        cd_col = cd_all                                           # (H, 2W)
    else:
        for b in range(bb):
            cdcol_ref[:, b * w2:(b + 1) * w2] = cd_all[b * h:(b + 1) * h, :]
        cd_col = cdcol_ref[...]                                   # (H, BB*2W)

    # ---- stage 2: forward left-multiply, column-batched (one push) ----
    g = jnp.dot(L, cd_col, preferred_element_type=jnp.float32)    # (2H, BB*2W)

    # Quadrant combine + data consistency  u = k + m*(usk - k); the u halves
    # are written straight into the column-batched k-space output block
    # (no concatenates, no extra scratch: this write is required anyway).
    for b in range(bb):
        re0 = b * w2
        im0 = re0 + w
        k_re = g[:h, re0:re0 + w] + g[h:, im0:im0 + w]   #  s*(C x C - S x S)
        k_im = g[:h, im0:im0 + w] - g[h:, re0:re0 + w]   # -s*(C x S + S x C)
        usk = usk2_ref[b]                                # (H, 2W) = [re | im]
        ksp_ref[0, :, re0:re0 + w] = k_re + m * (usk[:, :w] - k_re)
        ksp_ref[0, :, im0:im0 + w] = k_im + m * (usk[:, w:] - k_im)

    # ---- stage 3: inverse left-multiply, column-batched (one push) ----
    pq = jnp.dot(L, ksp_ref[0], preferred_element_type=jnp.float32)  # (2H, BB*2W)

    # Column -> row pivot: assemble the [P | Q] operand of the final
    # right-multiply in a row-batched scratch (this assembly is needed anyway).
    for b in range(bb):
        re0 = b * w2
        im0 = re0 + w
        p = pq[:h, re0:re0 + w] - pq[h:, im0:im0 + w]    # rs*(C u_re - S u_im)
        q = pq[h:, re0:re0 + w] + pq[:h, im0:im0 + w]    # rs*(S u_re + C u_im)
        pqrow_ref[b * h:(b + 1) * h, :w] = p
        pqrow_ref[b * h:(b + 1) * h, w:] = q

    # ---- stage 4: inverse right-multiply, row-batched (one push) ----
    img_all = jnp.dot(pqrow_ref[...], R2,
                      preferred_element_type=jnp.float32)          # (BB*H, W)
    for b in range(bb):
        img_ref[b] = img_all[b * h:(b + 1) * h, :]                 # (H, W) stores


def _dft_cos_sin(n):
    """Exact DFT angle matrices: cos/sin(2*pi*(k*l mod n)/n), (n, n) f32."""
    k = jnp.arange(n, dtype=jnp.int32)
    prod = (k[:, None] * k[None, :]) % n          # exact integer mod
    ang = (2.0 * math.pi / float(n)) * prod.astype(jnp.float32)
    return jnp.cos(ang), jnp.sin(ang)


def _vmem_limit_bytes():
    """Generation-aware VMEM budget: ~3/4 of physical VMEM (48 MiB on v7x's
    64 MiB, 96 MiB on v5e/v6e's 128 MiB)."""
    phys = 64 * 1024 * 1024                       # conservative default (v7x)
    try:
        phys = int(pltpu.get_tpu_info().vmem_capacity_bytes)
    except Exception:
        pass
    phys = max(64 * 1024 * 1024, min(phys, 256 * 1024 * 1024))
    return (phys * 3) // 4


def _pick_batch_block(b, h, w, const_bytes, vmem_limit, max_bb=8):
    """Largest divisor of B that fits the per-step VMEM budget AND keeps the
    grid >= 2 steps (v7x has 2 TensorCores; grid=1 also kills pipelining)."""
    # Per batch element per step: double-buffered pipelined blocks
    # (pred + usk + ksp + img ~ 48*H*W), scratches (~16*H*W) and live
    # matmul intermediates (~32*H*W)  ->  ~96*H*W bytes.
    per_image = 96 * h * w
    budget = vmem_limit - const_bytes - (4 << 20)     # headroom for the rest
    cap = max(1, min(max_bb, budget // per_image))
    bb = 1
    for cand in range(1, min(b, cap) + 1):
        if b % cand == 0 and (b // cand) >= min(2, b):
            bb = cand
    return bb


def data_consistency_layer(predicted_img, us_kspace, us_mask):
    """predicted_img: (B,1,H,W) f32, us_kspace: (B,2,H,W) f32 (ch0=re, ch1=im),
    us_mask: (1,H,W,1) f32.  Returns (img (B,1,H,W), updated_kspace (B,H,W,2))."""
    B, _, H, W = predicted_img.shape
    pred = predicted_img[:, 0, :, :].astype(jnp.float32)               # (B, H, W)
    # lane-dense [re | im] k-space slab, (B, H, 2W)
    usk2 = jnp.concatenate(
        [us_kspace[:, 0], us_kspace[:, 1]], axis=-1).astype(jnp.float32)
    m = us_mask.astype(jnp.float32).reshape(H, W)

    ch, sh = _dft_cos_sin(H)
    cw, sw = _dft_cos_sin(W)
    rs = float((H * W) ** -0.25)          # sqrt(1/sqrt(H*W)), folded on each side
    Lmat = rs * jnp.concatenate([ch, sh], axis=0)                      # (2H, H)
    W1 = rs * jnp.concatenate([cw, -sw], axis=1)                       # (W, 2W)
    R2 = rs * jnp.concatenate([cw, -sw], axis=0)                       # (2W, W)

    const_bytes = 4 * (2 * H * H + 4 * W * W + H * W)
    vmem_limit = _vmem_limit_bytes()
    BB = _pick_batch_block(B, H, W, const_bytes, vmem_limit)
    G = B // BB

    kernel = functools.partial(_dc_kernel, bb=BB, h=H, w=W)
    const_spec = pl.BlockSpec(memory_space=pltpu.MemorySpace.VMEM)

    img3, ksp3 = pl.pallas_call(
        kernel,
        out_shape=(
            jax.ShapeDtypeStruct((B, H, W), jnp.float32),
            jax.ShapeDtypeStruct((G, H, BB * 2 * W), jnp.float32),
        ),
        grid_spec=pltpu.PrefetchScalarGridSpec(
            num_scalar_prefetch=0,
            grid=(G,),
            in_specs=[
                const_spec,                                           # L
                const_spec,                                           # W1
                const_spec,                                           # R2
                const_spec,                                           # mask
                pl.BlockSpec((BB, H, W), lambda g: (g, 0, 0)),        # pred
                pl.BlockSpec((BB, H, 2 * W), lambda g: (g, 0, 0)),    # usk2
            ],
            out_specs=[
                pl.BlockSpec((BB, H, W), lambda g: (g, 0, 0)),        # image
                pl.BlockSpec((1, H, BB * 2 * W), lambda g: (g, 0, 0)),  # k-space
            ],
            scratch_shapes=[
                pltpu.VMEM((H, BB * 2 * W), jnp.float32),   # column-batched cd
                pltpu.VMEM((BB * H, 2 * W), jnp.float32),   # row-batched [P|Q]
            ],
        ),
        compiler_params=pltpu.CompilerParams(
            dimension_semantics=("parallel",),   # batch grid: 2 TCs on v7x
            vmem_limit_bytes=int(vmem_limit),
        ),
    )(Lmat, W1, R2, m, pred, usk2)

    # Assemble the torch-style outputs once, outside the kernel (single XLA ops).
    img = img3.reshape(B, 1, H, W)
    updated_kspace = jnp.transpose(
        ksp3.reshape(G, H, BB, 2, W), (0, 2, 1, 4, 3)).reshape(B, H, W, 2)
    return img, updated_kspace


def _reference(predicted_img, us_kspace, us_mask):
    """Pure-JAX reference mirroring torch.rfft/ifft (normalized, onesided=False)."""
    B, _, H, W = predicted_img.shape
    pred = predicted_img[:, 0, :, :].astype(jnp.float32)
    scale = 1.0 / math.sqrt(H * W)
    K = jnp.fft.fft2(pred) * scale                              # (B, H, W) complex
    k_pred = jnp.stack([K.real, K.imag], axis=-1)               # (B, H, W, 2)
    usk = jnp.transpose(us_kspace, (0, 2, 3, 1))                # (B, H, W, 2)
    m = us_mask
    upd = m * usk + (1.0 - m) * k_pred
    upd_c = upd[..., 0] + 1j * upd[..., 1]
    img = (jnp.fft.ifft2(upd_c) * (H * W) * scale).real         # normalized ifft
    return img[:, None, :, :].astype(jnp.float32), upd


def _run_case(key, B, H, W):
    k1, k2, k3 = jax.random.split(key, 3)
    predicted_img = jax.random.normal(k1, (B, 1, H, W), dtype=jnp.float32)
    us_kspace = jax.random.normal(k2, (B, 2, H, W), dtype=jnp.float32)
    us_mask = (jax.random.uniform(k3, (1, H, W, 1)) < 0.4).astype(jnp.float32)

    img, ksp = data_consistency_layer(predicted_img, us_kspace, us_mask)
    jax.block_until_ready((img, ksp))

    img_ref, ksp_ref = _reference(predicted_img, us_kspace, us_mask)
    assert img.shape == (B, 1, H, W) and ksp.shape == (B, H, W, 2)
    assert jnp.max(jnp.abs(img - img_ref)) < 1e-4, "img mismatch"
    assert jnp.max(jnp.abs(ksp - ksp_ref)) < 1e-4, "kspace mismatch"


if __name__ == "__main__":
    key = jax.random.PRNGKey(0)
    ka, kb = jax.random.split(key)
    _run_case(ka, B=2, H=16, W=16)   # BB=1 path, grid of 2
    _run_case(kb, B=8, H=16, W=16)   # BB>1 path (column-batched pivot), grid of 2
    print("KERNEL_OK")
</pallas_src>

<mosaic_0001>
module attributes {stable_mosaic.version = 11 : i64} {
  func.func @_dc_kernel(%arg0: i32, %arg1: memref<32x16xf32, #tpu.memory_space<vmem>>, %arg2: memref<16x32xf32, #tpu.memory_space<vmem>>, %arg3: memref<32x16xf32, #tpu.memory_space<vmem>>, %arg4: memref<16x16xf32, #tpu.memory_space<vmem>>, %arg5: memref<1x16x16xf32, #tpu.memory_space<vmem>>, %arg6: memref<1x16x32xf32, #tpu.memory_space<vmem>>, %arg7: memref<1x16x16xf32, #tpu.memory_space<vmem>>, %arg8: memref<1x16x32xf32, #tpu.memory_space<vmem>>, %arg9: memref<16x32xf32, #tpu.memory_space<vmem>>, %arg10: memref<16x32xf32, #tpu.memory_space<vmem>>) attributes {dimension_semantics = [#tpu.dimension_semantics<parallel>], iteration_bounds = array<i64: 2>, scalar_prefetch = 0 : i64, scratch_operands = 2 : i64, tpu.core_type = #tpu.core_type<tc>, window_params = [{pipeline_mode = #tpu.pipeline_mode<synchronous>, transform_indices = @transform_0, window_bounds = array<i64: 32, 16>}, {pipeline_mode = #tpu.pipeline_mode<synchronous>, transform_indices = @transform_1, window_bounds = array<i64: 16, 32>}, {pipeline_mode = #tpu.pipeline_mode<synchronous>, transform_indices = @transform_2, window_bounds = array<i64: 32, 16>}, {pipeline_mode = #tpu.pipeline_mode<synchronous>, transform_indices = @transform_3, window_bounds = array<i64: 16, 16>}, {transform_indices = @transform_4, window_bounds = array<i64: 1, 16, 16>}, {transform_indices = @transform_5, window_bounds = array<i64: 1, 16, 32>}, {transform_indices = @transform_6, window_bounds = array<i64: 1, 16, 16>}, {transform_indices = @transform_7, window_bounds = array<i64: 1, 16, 32>}]} {
    %c0 = arith.constant 0 : index
    %c0_0 = arith.constant 0 : index
    %0 = vector.load %arg1[%c0, %c0_0] : memref<32x16xf32, #tpu.memory_space<vmem>>, vector<32x16xf32>
    %c0_1 = arith.constant 0 : index
    %c0_2 = arith.constant 0 : index
    %1 = vector.load %arg2[%c0_1, %c0_2] : memref<16x32xf32, #tpu.memory_space<vmem>>, vector<16x32xf32>
    %c0_3 = arith.constant 0 : index
    %c0_4 = arith.constant 0 : index
    %2 = vector.load %arg3[%c0_3, %c0_4] : memref<32x16xf32, #tpu.memory_space<vmem>>, vector<32x16xf32>
    %c0_5 = arith.constant 0 : index
    %c0_6 = arith.constant 0 : index
    %3 = vector.load %arg4[%c0_5, %c0_6] : memref<16x16xf32, #tpu.memory_space<vmem>>, vector<16x16xf32>
    %c0_7 = arith.constant 0 : index
    %c0_8 = arith.constant 0 : index
    %c0_9 = arith.constant 0 : index
    %4 = vector.load %arg5[%c0_7, %c0_8, %c0_9] : memref<1x16x16xf32, #tpu.memory_space<vmem>>, vector<1x16x16xf32>
    %5 = vector.shape_cast %4 : vector<1x16x16xf32> to vector<16x16xf32>
    %cst = arith.constant dense<0.000000e+00> : vector<16x32xf32>
    %6 = tpu.matmul %5, %1, %cst {dimension_numbers = #tpu.dot_dimension_numbers<[1], [0], [0], [1], [0, 0, 1, 1], [], []>} : vector<16x16xf32>, vector<16x32xf32>, vector<16x32xf32> -> vector<16x32xf32>
    %cst_10 = arith.constant dense<0.000000e+00> : vector<32x32xf32>
    %7 = tpu.matmul %0, %6, %cst_10 {dimension_numbers = #tpu.dot_dimension_numbers<[1], [0], [0], [1], [0, 0, 1, 1], [], []>} : vector<32x16xf32>, vector<16x32xf32>, vector<32x32xf32> -> vector<32x32xf32>
    %8 = vector.extract_strided_slice %7 {offsets = [0, 0], sizes = [16, 16], strides = [1, 1]} : vector<32x32xf32> to vector<16x16xf32>
    %9 = vector.extract_strided_slice %7 {offsets = [16, 16], sizes = [16, 16], strides = [1, 1]} : vector<32x32xf32> to vector<16x16xf32>
    %10 = arith.addf %8, %9 : vector<16x16xf32>
    %11 = vector.extract_strided_slice %7 {offsets = [0, 16], sizes = [16, 16], strides = [1, 1]} : vector<32x32xf32> to vector<16x16xf32>
    %12 = vector.extract_strided_slice %7 {offsets = [16, 0], sizes = [16, 16], strides = [1, 1]} : vector<32x32xf32> to vector<16x16xf32>
    %13 = arith.subf %11, %12 : vector<16x16xf32>
    %c0_11 = arith.constant 0 : index
    %c0_12 = arith.constant 0 : index
    %c0_13 = arith.constant 0 : index
    %14 = vector.load %arg6[%c0_11, %c0_12, %c0_13] : memref<1x16x32xf32, #tpu.memory_space<vmem>>, vector<1x16x32xf32>
    %15 = vector.shape_cast %14 : vector<1x16x32xf32> to vector<16x32xf32>
    %16 = vector.extract_strided_slice %15 {offsets = [0, 0], sizes = [16, 16], strides = [1, 1]} : vector<16x32xf32> to vector<16x16xf32>
    %17 = arith.subf %16, %10 : vector<16x16xf32>
    %18 = arith.mulf %3, %17 : vector<16x16xf32>
    %19 = arith.addf %10, %18 : vector<16x16xf32>
    %c0_14 = arith.constant 0 : index
    %c0_15 = arith.constant 0 : index
    %c0_16 = arith.constant 0 : index
    %20 = vector.load %arg8[%c0_14, %c0_15, %c0_16] : memref<1x16x32xf32, #tpu.memory_space<vmem>>, vector<1x16x16xf32>
    %21 = vector.shape_cast %20 : vector<1x16x16xf32> to vector<16x16xf32>
    %22 = vector.shape_cast %19 : vector<16x16xf32> to vector<1x16x16xf32>
    tpu.vector_store %arg8[%c0_14, %c0_15, %c0_16], %22 {strides = array<i32>} : memref<1x16x32xf32, #tpu.memory_space<vmem>>, vector<1x16x16xf32>,
    %23 = vector.extract_strided_slice %15 {offsets = [0, 16], sizes = [16, 16], strides = [1, 1]} : vector<16x32xf32> to vector<16x16xf32>
    %24 = arith.subf %23, %13 : vector<16x16xf32>
    %25 = arith.mulf %3, %24 : vector<16x16xf32>
    %26 = arith.addf %13, %25 : vector<16x16xf32>
    %c0_17 = arith.constant 0 : index
    %c0_18 = arith.constant 0 : index
    %c16 = arith.constant 16 : index
    %27 = vector.load %arg8[%c0_17, %c0_18, %c16] : memref<1x16x32xf32, #tpu.memory_space<vmem>>, vector<1x16x16xf32>
    %28 = vector.shape_cast %27 : vector<1x16x16xf32> to vector<16x16xf32>
    %29 = vector.shape_cast %26 : vector<16x16xf32> to vector<1x16x16xf32>
    tpu.vector_store %arg8[%c0_17, %c0_18, %c16], %29 {strides = array<i32>} : memref<1x16x32xf32, #tpu.memory_space<vmem>>, vector<1x16x16xf32>,
    %c0_19 = arith.constant 0 : index
    %c0_20 = arith.constant 0 : index
    %c0_21 = arith.constant 0 : index
    %30 = vector.load %arg8[%c0_19, %c0_20, %c0_21] : memref<1x16x32xf32, #tpu.memory_space<vmem>>, vector<1x16x32xf32>
    %31 = vector.shape_cast %30 : vector<1x16x32xf32> to vector<16x32xf32>
    %cst_22 = arith.constant dense<0.000000e+00> : vector<32x32xf32>
    %32 = tpu.matmul %0, %31, %cst_22 {dimension_numbers = #tpu.dot_dimension_numbers<[1], [0], [0], [1], [0, 0, 1, 1], [], []>} : vector<32x16xf32>, vector<16x32xf32>, vector<32x32xf32> -> vector<32x32xf32>
    %33 = vector.extract_strided_slice %32 {offsets = [0, 0], sizes = [16, 16], strides = [1, 1]} : vector<32x32xf32> to vector<16x16xf32>
    %34 = vector.extract_strided_slice %32 {offsets = [16, 16], sizes = [16, 16], strides = [1, 1]} : vector<32x32xf32> to vector<16x16xf32>
    %35 = arith.subf %33, %34 : vector<16x16xf32>
    %36 = vector.extract_strided_slice %32 {offsets = [16, 0], sizes = [16, 16], strides = [1, 1]} : vector<32x32xf32> to vector<16x16xf32>
    %37 = vector.extract_strided_slice %32 {offsets = [0, 16], sizes = [16, 16], strides = [1, 1]} : vector<32x32xf32> to vector<16x16xf32>
    %38 = arith.addf %36, %37 : vector<16x16xf32>
    %c0_23 = arith.constant 0 : index
    %c0_24 = arith.constant 0 : index
    %39 = vector.load %arg10[%c0_23, %c0_24] : memref<16x32xf32, #tpu.memory_space<vmem>>, vector<16x16xf32>
    tpu.vector_store %arg10[%c0_23, %c0_24], %35 {strides = array<i32>} : memref<16x32xf32, #tpu.memory_space<vmem>>, vector<16x16xf32>,
    %c0_25 = arith.constant 0 : index
    %c16_26 = arith.constant 16 : index
    %40 = vector.load %arg10[%c0_25, %c16_26] : memref<16x32xf32, #tpu.memory_space<vmem>>, vector<16x16xf32>
    tpu.vector_store %arg10[%c0_25, %c16_26], %38 {strides = array<i32>} : memref<16x32xf32, #tpu.memory_space<vmem>>, vector<16x16xf32>,
    %c0_27 = arith.constant 0 : index
    %c0_28 = arith.constant 0 : index
    %41 = vector.load %arg10[%c0_27, %c0_28] : memref<16x32xf32, #tpu.memory_space<vmem>>, vector<16x32xf32>
    %cst_29 = arith.constant dense<0.000000e+00> : vector<16x16xf32>
    %42 = tpu.matmul %41, %2, %cst_29 {dimension_numbers = #tpu.dot_dimension_numbers<[1], [0], [0], [1], [0, 0, 1, 1], [], []>} : vector<16x32xf32>, vector<32x16xf32>, vector<16x16xf32> -> vector<16x16xf32>
    %c0_30 = arith.constant 0 : index
    %c0_31 = arith.constant 0 : index
    %c0_32 = arith.constant 0 : index
    %43 = vector.load %arg7[%c0_30, %c0_31, %c0_32] : memref<1x16x16xf32, #tpu.memory_space<vmem>>, vector<1x16x16xf32>
    %44 = vector.shape_cast %43 : vector<1x16x16xf32> to vector<16x16xf32>
    %45 = vector.shape_cast %42 : vector<16x16xf32> to vector<1x16x16xf32>
    tpu.vector_store %arg7[%c0_30, %c0_31, %c0_32], %45 {strides = array<i32>} : memref<1x16x16xf32, #tpu.memory_space<vmem>>, vector<1x16x16xf32>,
    return
  }
  func.func @transform_0(%arg0: i32) -> (i32, i32) {
    %c0_i32 = arith.constant 0 : i32
    %c0_i32_0 = arith.constant 0 : i32
    %c0_i32_1 = arith.constant 0 : i32
    return %c0_i32, %c0_i32_0 : i32, i32
  }
  func.func @transform_1(%arg0: i32) -> (i32, i32) {
    %c0_i32 = arith.constant 0 : i32
    %c0_i32_0 = arith.constant 0 : i32
    %c0_i32_1 = arith.constant 0 : i32
    return %c0_i32, %c0_i32_0 : i32, i32
  }
  func.func @transform_2(%arg0: i32) -> (i32, i32) {
    %c0_i32 = arith.constant 0 : i32
    %c0_i32_0 = arith.constant 0 : i32
    %c0_i32_1 = arith.constant 0 : i32
    return %c0_i32, %c0_i32_0 : i32, i32
  }
  func.func @transform_3(%arg0: i32) -> (i32, i32) {
    %c0_i32 = arith.constant 0 : i32
    %c0_i32_0 = arith.constant 0 : i32
    %c0_i32_1 = arith.constant 0 : i32
    return %c0_i32, %c0_i32_0 : i32, i32
  }
  func.func @transform_4(%arg0: i32) -> (i32, i32, i32) {
    %c0_i32 = arith.constant 0 : i32
    %c0_i32_0 = arith.constant 0 : i32
    %c0_i32_1 = arith.constant 0 : i32
    return %arg0, %c0_i32, %c0_i32_0 : i32, i32, i32
  }
  func.func @transform_5(%arg0: i32) -> (i32, i32, i32) {
    %c0_i32 = arith.constant 0 : i32
    %c0_i32_0 = arith.constant 0 : i32
    %c0_i32_1 = arith.constant 0 : i32
    return %arg0, %c0_i32, %c0_i32_0 : i32, i32, i32
  }
  func.func @transform_6(%arg0: i32) -> (i32, i32, i32) {
    %c0_i32 = arith.constant 0 : i32
    %c0_i32_0 = arith.constant 0 : i32
    %c0_i32_1 = arith.constant 0 : i32
    return %arg0, %c0_i32, %c0_i32_0 : i32, i32, i32
  }
  func.func @transform_7(%arg0: i32) -> (i32, i32, i32) {
    %c0_i32 = arith.constant 0 : i32
    %c0_i32_0 = arith.constant 0 : i32
    %c0_i32_1 = arith.constant 0 : i32
    return %arg0, %c0_i32, %c0_i32_0 : i32, i32, i32
  }
}

</mosaic_0001>

<llo_original>
// kernel: tpu_custom_call.1
$region0: #{tpu_custom_call.1}
  #allocation0 [shape = 'u32[]', space=smem, size = 0x4, offset = 0x4, fixed_abs, tag = 'smem constant byte address 0x4 - core index']
  #allocation1 [shape = 'u32[72,128]{1,0:T(1,128)}', space=vmem, size = 0x9000, scoped, tag = 'internal scratch']
  #allocation2 [shape = 'f32[16,32]{1,0:T(8,128)}', space=vmem, size = 0x2000, scoped, tag = 'scratch operand']
  #allocation3 [shape = 'f32[16,32]{1,0:T(8,128)}', space=vmem, size = 0x2000, scoped, tag = 'scratch operand']
  %s0 = inlined_call_operand.vmem [shape: f32[32,16], index: 0, kind: input, shape index: {}]
  %s1 = inlined_call_operand.vmem [shape: f32[16,32], index: 1, kind: input, shape index: {}]
  %s2 = inlined_call_operand.vmem [shape: f32[32,16], index: 2, kind: input, shape index: {}]
  %s3 = inlined_call_operand.hbm [shape: f32[16,16], index: 3, kind: input, shape index: {}]
  %s4 = inlined_call_operand.vmem [shape: f32[2,16,16], index: 4, kind: input, shape index: {}]
  %s5 = inlined_call_operand.vmem [shape: f32[2,16,32], index: 5, kind: input, shape index: {}]
  %s6 = inlined_call_operand.hbm [shape: f32[2,16,16], index: 6, kind: output, shape index: {0}]
  %s7 = inlined_call_operand.hbm [shape: f32[2,16,32], index: 7, kind: output, shape index: {1}]
  %8 = xla_tuple %s6, %s7
  %s9 = sld [smem:[#allocation0]]
  $region69: #{tpu_custom_call.1} parent=0
    _
  %s11 = ssub.s32 1, %s9
  %s12 = scalar_select 0, %s11, %s9
  $region1: #{tpu_custom_call.1} parent=0
    #allocation4 [shape = 'u8[8192]{0}', space=vmem, size = 0x2000, scoped, tag = 'input window, operand 3, single buffered']
    #allocation5 [shape = 's32[2]{0}', space=sflag, size = 0x8, scoped, tag = 'scoped memory for tpu_custom_call.1']
    #allocation6 [shape = 's32[2]{0}', space=sflag, size = 0x8, scoped, tag = 'scoped memory for tpu_custom_call.1']
    #allocation7 [shape = 'u8[16384]{0}', space=vmem, size = 0x4000, scoped, tag = 'output window, operand 0']
    #allocation8 [shape = 'u8[16384]{0}', space=vmem, size = 0x4000, scoped, tag = 'output window, operand 1']
    #allocation9 [shape = 's32[2]{0}', space=sflag, size = 0x8, scoped, tag = 'scoped memory for tpu_custom_call.1']
    %13 = vsyncpa [#allocation5], 0
    %14 = vsyncpa [#allocation6], 0
    %s15 = scalar_lea.sflag [#allocation6], 1
    %16 = vsyncpa %s15, 0
    %17 = vsyncpa [#allocation9], 0
    %s18 = scalar_lea.sflag [#allocation9], 1
    %19 = vsyncpa %s18, 0
    loop: start=0, step=1, limit=4
    $region2: #{tpu_custom_call.1} parent=1 // loop_pre_header
      _
    $region3: #{tpu_custom_call.1} parent=1 // loop_header
      %s21 = sphi 0, %s25
      %p22 = scmp.ge.s32.totalorder %s21, 4
      %s29 = sphi 0, %s29
      %s31 = sphi 0, %s29
      %s32 = sphi 0, %s31
      %s46 = sphi 0, %s32
      %s50 = sphi 0, %s50
      %s52 = sphi 0, %s50
      %s53 = sphi 0, %s52
      %s67 = sphi 0, %s53
      %s71 = sphi 0, %s71
      %s73 = sphi 0, %s71
      %s74 = sphi 0, %s73
      %s88 = sphi 0, %s74
      %s92 = sphi 0, %s92
      %s94 = sphi 0, %s92
      %s95 = sphi 0, %s94
      %s109 = sphi 0, %s95
      %s115 = sphi 0, %s117
      %s118 = sphi 0, %s115
      %s119 = sphi 0, %s118
      %s135 = sphi 0, %s119
      %s141 = sphi 0, %s143
      %s144 = sphi 0, %s141
      %s145 = sphi 0, %s144
      %s161 = sphi 0, %s145
      %s167 = sphi 0, %s169
      %s170 = sphi 0, %s167
      %s171 = sphi 0, %s170
      %s187 = sphi 0, %s171
      %s193 = sphi 0, %s195
      %s196 = sphi 0, %s193
      %s197 = sphi 0, %s196
      %s213 = sphi 0, %s197
    $region4: #{tpu_custom_call.1} parent=1 // loop_header_branch
      %24 = sbr.rel (%p22) target = $region8
    $region5: #{tpu_custom_call.1} parent=1 // loop_body
      %s26 = ssub.s32 %s21, 1
      %s27 = ssub.s32 %s21, 2
      %s28 = sadd.s32 %s21, 1
      %s30 = sadd.s32 %s29, 1
      %p33 = scmp.eq.s32.totalorder %s21, 1
      %p34 = scmp.ne.s32.totalorder %s29, %s31
      %p35 = scmp.eq.s32.totalorder %s21, 0
      %p36 = por %p34, %p35
      %p37 = scmp.ne.s32.totalorder %s29, %s31
      %p38 = scmp.eq.s32.totalorder %s26, 1
      %p39 = por %p37, %p38
      %p40 = scmp.ne.s32.totalorder %s31, %s32
      %p41 = scmp.eq.s32.totalorder %s26, 0
      %p42 = por %p40, %p41
      %p43 = scmp.ne.s32.totalorder %s31, %s32
      %p44 = scmp.eq.s32.totalorder %s27, 1
      %p45 = por %p43, %p44
      %p47 = scmp.ne.s32.totalorder %s32, %s46
      %p48 = scmp.eq.s32.totalorder %s27, 0
      %p49 = por %p47, %p48
      %s51 = sadd.s32 %s50, 1
      %p54 = scmp.eq.s32.totalorder %s21, 1
      %p55 = scmp.ne.s32.totalorder %s50, %s52
      %p56 = scmp.eq.s32.totalorder %s21, 0
      %p57 = por %p55, %p56
      %p58 = scmp.ne.s32.totalorder %s50, %s52
      %p59 = scmp.eq.s32.totalorder %s26, 1
      %p60 = por %p58, %p59
      %p61 = scmp.ne.s32.totalorder %s52, %s53
      %p62 = scmp.eq.s32.totalorder %s26, 0
      %p63 = por %p61, %p62
      %p64 = scmp.ne.s32.totalorder %s52, %s53
      %p65 = scmp.eq.s32.totalorder %s27, 1
      %p66 = por %p64, %p65
      %p68 = scmp.ne.s32.totalorder %s53, %s67
      %p69 = scmp.eq.s32.totalorder %s27, 0
      %p70 = por %p68, %p69
      %s72 = sadd.s32 %s71, 1
      %p75 = scmp.eq.s32.totalorder %s21, 1
      %p76 = scmp.ne.s32.totalorder %s71, %s73
      %p77 = scmp.eq.s32.totalorder %s21, 0
      %p78 = por %p76, %p77
      %p79 = scmp.ne.s32.totalorder %s71, %s73
      %p80 = scmp.eq.s32.totalorder %s26, 1
      %p81 = por %p79, %p80
      %p82 = scmp.ne.s32.totalorder %s73, %s74
      %p83 = scmp.eq.s32.totalorder %s26, 0
      %p84 = por %p82, %p83
      %p85 = scmp.ne.s32.totalorder %s73, %s74
      %p86 = scmp.eq.s32.totalorder %s27, 1
      %p87 = por %p85, %p86
      %p89 = scmp.ne.s32.totalorder %s74, %s88
      %p90 = scmp.eq.s32.totalorder %s27, 0
      %p91 = por %p89, %p90
      %s93 = sadd.s32 %s92, 1
      %p96 = scmp.eq.s32.totalorder %s21, 1
      %p97 = scmp.ne.s32.totalorder %s92, %s94
      %p98 = scmp.eq.s32.totalorder %s21, 0
      %p99 = por %p97, %p98
      %p100 = scmp.ne.s32.totalorder %s92, %s94
      %p101 = scmp.eq.s32.totalorder %s26, 1
      %p102 = por %p100, %p101
      %p103 = scmp.ne.s32.totalorder %s94, %s95
      %p104 = scmp.eq.s32.totalorder %s26, 0
      %p105 = por %p103, %p104
      %p106 = scmp.ne.s32.totalorder %s94, %s95
      %p107 = scmp.eq.s32.totalorder %s27, 1
      %p108 = por %p106, %p107
      %p110 = scmp.ne.s32.totalorder %s95, %s109
      %p111 = scmp.eq.s32.totalorder %s27, 0
      %p112 = por %p110, %p111
      %s113 = ssub.s32 %s21, %s28
      %p114 = scmp.eq.s32.totalorder %s113, 0
      %s116 = sadd.s32 %s115, 1
      %s117 = scalar_select %p114, %s115, %s116
      %p120 = pneg %p114
      %p121 = scmp.eq.s32.totalorder %s21, 1
      %p122 = por %p120, %p121
      %p123 = scmp.ne.s32.totalorder %s115, %s118
      %p124 = scmp.eq.s32.totalorder %s21, 0
      %p125 = por %p123, %p124
      %p126 = scmp.ne.s32.totalorder %s115, %s118
      %p127 = scmp.eq.s32.totalorder %s26, 1
      %p128 = por %p126, %p127
      %p129 = scmp.ne.s32.totalorder %s118, %s119
      %p130 = scmp.eq.s32.totalorder %s26, 0
      %p131 = por %p129, %p130
      %p132 = scmp.ne.s32.totalorder %s118, %s119
      %p133 = scmp.eq.s32.totalorder %s27, 1
      %p134 = por %p132, %p133
      %p136 = scmp.ne.s32.totalorder %s119, %s135
      %p137 = scmp.eq.s32.totalorder %s27, 0
      %p138 = por %p136, %p137
      %s139 = ssub.s32 %s21, %s28
      %p140 = scmp.eq.s32.totalorder %s139, 0
      %s142 = sadd.s32 %s141, 1
      %s143 = scalar_select %p140, %s141, %s142
      %p146 = pneg %p140
      %p147 = scmp.eq.s32.totalorder %s21, 1
      %p148 = por %p146, %p147
      %p149 = scmp.ne.s32.totalorder %s141, %s144
      %p150 = scmp.eq.s32.totalorder %s21, 0
      %p151 = por %p149, %p150
      %p152 = scmp.ne.s32.totalorder %s141, %s144
      %p153 = scmp.eq.s32.totalorder %s26, 1
      %p154 = por %p152, %p153
      %p155 = scmp.ne.s32.totalorder %s144, %s145
      %p156 = scmp.eq.s32.totalorder %s26, 0
      %p157 = por %p155, %p156
      %p158 = scmp.ne.s32.totalorder %s144, %s145
      %p159 = scmp.eq.s32.totalorder %s27, 1
      %p160 = por %p158, %p159
      %p162 = scmp.ne.s32.totalorder %s145, %s161
      %p163 = scmp.eq.s32.totalorder %s27, 0
      %p164 = por %p162, %p163
      %s165 = ssub.s32 %s21, %s28
      %p166 = scmp.eq.s32.totalorder %s165, 0
      %s168 = sadd.s32 %s167, 1
      %s169 = scalar_select %p166, %s167, %s168
      %p172 = pneg %p166
      %p173 = scmp.eq.s32.totalorder %s21, 1
      %p174 = por %p172, %p173
      %p175 = scmp.ne.s32.totalorder %s167, %s170
      %p176 = scmp.eq.s32.totalorder %s21, 0
      %p177 = por %p175, %p176
      %p178 = scmp.ne.s32.totalorder %s167, %s170
      %p179 = scmp.eq.s32.totalorder %s26, 1
      %p180 = por %p178, %p179
      %p181 = scmp.ne.s32.totalorder %s170, %s171
      %p182 = scmp.eq.s32.totalorder %s26, 0
      %p183 = por %p181, %p182
      %p184 = scmp.ne.s32.totalorder %s170, %s171
      %p185 = scmp.eq.s32.totalorder %s27, 1
      %p186 = por %p184, %p185
      %p188 = scmp.ne.s32.totalorder %s171, %s187
      %p189 = scmp.eq.s32.totalorder %s27, 0
      %p190 = por %p188, %p189
      %s191 = ssub.s32 %s21, %s28
      %p192 = scmp.eq.s32.totalorder %s191, 0
      %s194 = sadd.s32 %s193, 1
      %s195 = scalar_select %p192, %s193, %s194
      %p198 = pneg %p192
      %p199 = scmp.eq.s32.totalorder %s21, 1
      %p200 = por %p198, %p199
      %p201 = scmp.ne.s32.totalorder %s193, %s196
      %p202 = scmp.eq.s32.totalorder %s21, 0
      %p203 = por %p201, %p202
      %p204 = scmp.ne.s32.totalorder %s193, %s196
      %p205 = scmp.eq.s32.totalorder %s26, 1
      %p206 = por %p204, %p205
      %p207 = scmp.ne.s32.totalorder %s196, %s197
      %p208 = scmp.eq.s32.totalorder %s26, 0
      %p209 = por %p207, %p208
      %p210 = scmp.ne.s32.totalorder %s196, %s197
      %p211 = scmp.eq.s32.totalorder %s27, 1
      %p212 = por %p210, %p211
      %p214 = scmp.ne.s32.totalorder %s197, %s213
      %p215 = scmp.eq.s32.totalorder %s27, 0
      %p216 = por %p214, %p215
      %p217 = scmp.le.s32.totalorder 1, %s21
      %p218 = scmp.lt.s32.totalorder %s21, 3
      %p219 = pnand %p217, %p218
      %p220 = pneg %p219
      // Predicated region
      $region9: #{tpu_custom_call.1} parent=5 // pred_check
        _
      $region10: #{tpu_custom_call.1} parent=5 // pred_check_branch
        %222 = sbr.rel (%p219) target = $region12
      $region11: #{tpu_custom_call.1} parent=5 // pred_region
        %s223 = ssub.s32 %s21, 1
        // Predicated region
        $region13: #{tpu_custom_call.1} parent=11 // pred_check
          %p224 = pneg %p42
        $region14: #{tpu_custom_call.1} parent=11 // pred_check_branch
          %226 = sbr.rel (%p224) target = $region16
        $region15: #{tpu_custom_call.1} parent=11 // pred_region
          _
        $region16: #{tpu_custom_call.1} parent=11 // pred_fallthru
          _
        // Predicated region
        $region17: #{tpu_custom_call.1} parent=11 // pred_check
          %p227 = pneg %p63
        $region18: #{tpu_custom_call.1} parent=11 // pred_check_branch
          %229 = sbr.rel (%p227) target = $region20
        $region19: #{tpu_custom_call.1} parent=11 // pred_region
          _
        $region20: #{tpu_custom_call.1} parent=11 // pred_fallthru
          _
        // Predicated region
        $region21: #{tpu_custom_call.1} parent=11 // pred_check
          %p230 = pneg %p84
        $region22: #{tpu_custom_call.1} parent=11 // pred_check_branch
          %232 = sbr.rel (%p230) target = $region24
        $region23: #{tpu_custom_call.1} parent=11 // pred_region
          _
        $region24: #{tpu_custom_call.1} parent=11 // pred_fallthru
          _
        // Predicated region
        $region25: #{tpu_custom_call.1} parent=11 // pred_check
          %p233 = pneg %p105
        $region26: #{tpu_custom_call.1} parent=11 // pred_check_branch
          %235 = sbr.rel (%p233) target = $region28
        $region27: #{tpu_custom_call.1} parent=11 // pred_region
          %237 = vsyncadd [#allocation5], 0
          %s238 = sshll.u32 %s3, 4
          %s239 = int_to_ptr.hbm [resolvable:$true] %s238
          %s240 = sshll.u32 [#allocation4], 4
          %s241 = int_to_ptr.vmem [resolvable:$true] %s240
          %246 = dma.hbm_to_vmem [thread:$0]  %s239, 256, %s241, [#allocation5], 128, 128, 8
        $region28: #{tpu_custom_call.1} parent=11 // pred_fallthru
          _
      $region12: #{tpu_custom_call.1} parent=5 // pred_fallthru
        _
      %p247 = scmp.lt.s32.totalorder %s21, 2
      // Predicated region
      $region29: #{tpu_custom_call.1} parent=5 // pred_check
        %p248 = pneg %p247
      $region30: #{tpu_custom_call.1} parent=5 // pred_check_branch
        %250 = sbr.rel (%p248) target = $region32
      $region31: #{tpu_custom_call.1} parent=5 // pred_region
        // Predicated region
        $region33: #{tpu_custom_call.1} parent=31 // pred_check
          %p251 = pneg %p125
        $region34: #{tpu_custom_call.1} parent=31 // pred_check_branch
          %253 = sbr.rel (%p251) target = $region36
        $region35: #{tpu_custom_call.1} parent=31 // pred_region
          %p254 = scmp.lt.s32.totalorder %s21, 1
          %s255 = scalar_select %p254, %s21, 1
          %s256 = smul.addr %s255, 2
          %s257 = smul.addr %s256, 8
          %s258 = scalar_lea.vmem %s4, %s257
        $region36: #{tpu_custom_call.1} parent=31 // pred_fallthru
          _
        // Predicated region
        $region37: #{tpu_custom_call.1} parent=31 // pred_check
          %p259 = pneg %p151
        $region38: #{tpu_custom_call.1} parent=31 // pred_check_branch
          %261 = sbr.rel (%p259) target = $region40
        $region39: #{tpu_custom_call.1} parent=31 // pred_region
          %p262 = scmp.lt.s32.totalorder %s21, 1
          %s263 = scalar_select %p262, %s21, 1
          %s264 = smul.addr %s263, 2
          %s265 = smul.addr %s264, 8
          %s266 = scalar_lea.vmem %s5, %s265
        $region40: #{tpu_custom_call.1} parent=31 // pred_fallthru
          _
      $region32: #{tpu_custom_call.1} parent=5 // pred_fallthru
        _
      %p267 = scmp.le.s32.totalorder 1, %s21
      %p268 = scmp.lt.s32.totalorder %s21, 3
      %p269 = pnand %p267, %p268
      %p270 = pneg %p269
      // Predicated region
      $region41: #{tpu_custom_call.1} parent=5 // pred_check
        _
      $region42: #{tpu_custom_call.1} parent=5 // pred_check_branch
        %272 = sbr.rel (%p269) target = $region44
      $region43: #{tpu_custom_call.1} parent=5 // pred_region
        %s273 = ssub.s32 %s21, 1
        // Predicated region
        $region45: #{tpu_custom_call.1} parent=43 // pred_check
          %p274 = pneg %p105
        $region46: #{tpu_custom_call.1} parent=43 // pred_check_branch
          %276 = sbr.rel (%p274) target = $region48
        $region47: #{tpu_custom_call.1} parent=43 // pred_region
          %278 = dma.done [#allocation5], 256
        $region48: #{tpu_custom_call.1} parent=43 // pred_fallthru
          _
        %p279 = pneg %p42
        %p280 = pneg %p39
        %p281 = pneg %p63
        %p282 = pneg %p60
        %p283 = pneg %p84
        %p284 = pneg %p81
        %p285 = pneg %p105
        %p286 = pneg %p102
        %p287 = scmp.lt.s32.totalorder %s26, 1
        %s288 = scalar_select %p287, %s26, 1
        %s289 = smul.addr %s288, 2
        %s290 = smul.addr %s289, 8
        %s291 = scalar_lea.vmem %s4, %s290
        %p292 = pneg %p131
        %p293 = pneg %p128
        %p294 = scmp.lt.s32.totalorder %s26, 1
        %s295 = scalar_select %p294, %s26, 1
        %s296 = smul.addr %s295, 2
        %s297 = smul.addr %s296, 8
        %s298 = scalar_lea.vmem %s5, %s297
        %p299 = pneg %p157
        %p300 = pneg %p154
        %p301 = pneg %p183
        %p302 = pneg %p180
        %s303 = sand.u32 %s170, 1
        %s304 = scalar_lea.sflag [#allocation6], %s303
        %s305 = sand.u32 %s170, 1
        %s306 = smul.addr %s305, 16
        %s307 = scalar_lea.vmem [#allocation7], %s306
        %p308 = pneg %p209
        %p309 = pneg %p206
        %s310 = sand.u32 %s196, 1
        %s311 = scalar_lea.sflag [#allocation9], %s310
        %s312 = sand.u32 %s196, 1
        %s313 = smul.addr %s312, 16
        %s314 = scalar_lea.vmem [#allocation8], %s313
        %p315 = scmp.lt.s32.totalorder %s26, 1
        %s316 = scalar_select %p315, %s26, 1
        %s317 = smul.addr %s316, 2
        %s318 = smul.addr %s317, 8
        %s319 = scalar_lea.vmem %s4, %s318
        %p320 = scmp.lt.s32.totalorder %s26, 1
        %s321 = scalar_select %p320, %s26, 1
        %s322 = smul.addr %s321, 2
        %s323 = smul.addr %s322, 8
        %s324 = scalar_lea.vmem %s5, %s323
        %v325 = vld [vmem:[%s0] sm:$0xff]
        %v326 = vld [vmem:[%s0 + $0x8] sm:$0xff]
        %v327 = vld [vmem:[%s0 + $0x10] sm:$0xff]
        %v328 = vld [vmem:[%s0 + $0x18] sm:$0xff]
        %v329 = vld [vmem:[%s1] sm:$0xff]
        %v330 = vld [vmem:[%s1 + $0x8] sm:$0xff]
        %v331 = vld [vmem:[%s2] sm:$0xff]
        %v332 = vld [vmem:[%s2 + $0x8] sm:$0xff]
        %v333 = vld [vmem:[%s2 + $0x10] sm:$0xff]
        %v334 = vld [vmem:[%s2 + $0x18] sm:$0xff]
        %v335 = vld [vmem:[#allocation4] sm:$0xff]
        %v336 = vld [vmem:[#allocation4 + $0x8] sm:$0xff]
        %v337 = vld [vmem:[%s319] sm:$0xff]
        %v338 = vld [vmem:[%s319 + $0x8] sm:$0xff]
        %vm339 = vcmask 130048
        %v341 = vsel %vm339, %v337, 0
        %v344 = vsel %vm339, %v338, 0
        %346 = vmatpush.msra.mxu0 0.0
        %347 = vmatpush.msra.mxu0 0.0
        %348 = vmatpush.msra.mxu0 0.0
        %349 = vmatpush.msra.mxu0 0.0
        %350 = vmatpush.msra.mxu0 0.0
        %351 = vmatpush.msra.mxu0 0.0
        %352 = vmatpush.msra.mxu0 0.0
        %353 = vmatpush.msra.mxu0 0.0
        %354 = vmatpush.msra.mxu0 0.0
        %355 = vmatpush.msra.mxu0 0.0
        %356 = vmatpush.msra.mxu0 0.0
        %357 = vmatpush.msra.mxu0 0.0
        %358 = vmatpush.msra.mxu0 0.0
        %359 = vmatpush.msra.mxu0 0.0
        %360 = vmatpush.msra.mxu0 %v330
        %361 = vmatpush.msra.mxu0 %v329
        %362 = vmatmul.f32.gmra.mxu0 %v341
        %v363 = vpop.f32.mrf.mxu0
        %v364 = vadd.f32 0.0, %v363
        %365 = vmatmul.f32.gmra.mxu0 %v344
        %v366 = vpop.f32.mrf.mxu0
        %v367 = vadd.f32 0.0, %v366
        %368 = vdwg.mxu0
        %v370 = vsel %vm339, %v325, 0
        %v373 = vsel %vm339, %v326, 0
        %v376 = vsel %vm339, %v327, 0
        %v379 = vsel %vm339, %v328, 0
        %381 = vmatpush.msra.mxu0 0.0
        %382 = vmatpush.msra.mxu0 0.0
        %383 = vmatpush.msra.mxu0 0.0
        %384 = vmatpush.msra.mxu0 0.0
        %385 = vmatpush.msra.mxu0 0.0
        %386 = vmatpush.msra.mxu0 0.0
        %387 = vmatpush.msra.mxu0 0.0
        %388 = vmatpush.msra.mxu0 0.0
        %389 = vmatpush.msra.mxu0 0.0
        %390 = vmatpush.msra.mxu0 0.0
        %391 = vmatpush.msra.mxu0 0.0
        %392 = vmatpush.msra.mxu0 0.0
        %393 = vmatpush.msra.mxu0 0.0
        %394 = vmatpush.msra.mxu0 0.0
        %395 = vmatpush.msra.mxu0 %v367
        %396 = vmatpush.msra.mxu0 %v364
        %397 = vmatmul.f32.gmra.mxu0 %v370
        %v398 = vpop.f32.mrf.mxu0
        %v399 = vadd.f32 0.0, %v398
        %400 = vmatmul.f32.gmra.mxu0 %v373
        %v401 = vpop.f32.mrf.mxu0
        %v402 = vadd.f32 0.0, %v401
        %403 = vmatmul.f32.gmra.mxu0 %v376
        %v404 = vpop.f32.mrf.mxu0
        %v405 = vadd.f32 0.0, %v404
        %406 = vmatmul.f32.gmra.mxu0 %v379
        %v407 = vpop.f32.mrf.mxu0
        %v408 = vadd.f32 0.0, %v407
        %409 = vdwg.mxu0
        %412 = vrot.lane.b32.xlu0 %v405, 112
        %v413 = vpop.permute.xlu0 %412
        %414 = vrot.lane.b32.xlu0 %v408, 112
        %v415 = vpop.permute.xlu0 %414
        %v418 = vadd.f32 %v399, %v413
        %v419 = vadd.f32 %v402, %v415
        %420 = vrot.lane.b32.xlu0 %v405, 16
        %v421 = vpop.permute.xlu0 %420
        %422 = vrot.lane.b32.xlu0 %v408, 16
        %v423 = vpop.permute.xlu0 %422
        %v426 = vsub.f32 %v399, %v421
        %v427 = vsub.f32 %v402, %v423
        %v428 = vld [vmem:[%s324] sm:$0xff]
        %v429 = vld [vmem:[%s324 + $0x8] sm:$0xff]
        %v430 = vsub.f32 %v428, %v418
        %v431 = vsub.f32 %v429, %v419
        %v432 = vmul.f32 %v335, %v430
        %v433 = vmul.f32 %v336, %v431
        %v434 = vadd.f32 %v418, %v432
        %v435 = vadd.f32 %v419, %v433
        %436 = vst.msk [vmem:[%s314] sm:$0xff] %vm339, %v434
        %437 = vst.msk [vmem:[%s314 + $0x8] sm:$0xff] %vm339, %v435
        %v438 = vsub.f32 %v428, %v426
        %v439 = vsub.f32 %v429, %v427
        %442 = vrot.lane.b32.xlu0 %v438, 112
        %v443 = vpop.permute.xlu0 %442
        %444 = vrot.lane.b32.xlu0 %v439, 112
        %v445 = vpop.permute.xlu0 %444
        %v448 = vmul.f32 %v335, %v443
        %v449 = vmul.f32 %v336, %v445
        %452 = vrot.lane.b32.xlu0 %v448, 16
        %v453 = vpop.permute.xlu0 %452
        %454 = vrot.lane.b32.xlu0 %v449, 16
        %v455 = vpop.permute.xlu0 %454
        %v458 = vadd.f32 %v426, %v453
        %v459 = vadd.f32 %v427, %v455
        %vm460 = vcmask 261248
        %461 = vst.msk [vmem:[%s314] sm:$0xff] %vm460, %v458
        %462 = vst.msk [vmem:[%s314 + $0x8] sm:$0xff] %vm460, %v459
        %v463 = vld [vmem:[%s314] sm:$0xff]
        %v464 = vld [vmem:[%s314 + $0x8] sm:$0xff]
        %465 = vmatpush.msra.mxu0 0.0
        %466 = vmatpush.msra.mxu0 0.0
        %467 = vmatpush.msra.mxu0 0.0
        %468 = vmatpush.msra.mxu0 0.0
        %469 = vmatpush.msra.mxu0 0.0
        %470 = vmatpush.msra.mxu0 0.0
        %471 = vmatpush.msra.mxu0 0.0
        %472 = vmatpush.msra.mxu0 0.0
        %473 = vmatpush.msra.mxu0 0.0
        %474 = vmatpush.msra.mxu0 0.0
        %475 = vmatpush.msra.mxu0 0.0
        %476 = vmatpush.msra.mxu0 0.0
        %477 = vmatpush.msra.mxu0 0.0
        %478 = vmatpush.msra.mxu0 0.0
        %479 = vmatpush.msra.mxu0 %v464
        %480 = vmatpush.msra.mxu0 %v463
        %481 = vmatmul.f32.gmra.mxu0 %v370
        %v482 = vpop.f32.mrf.mxu0
        %v483 = vadd.f32 0.0, %v482
        %484 = vmatmul.f32.gmra.mxu0 %v373
        %v485 = vpop.f32.mrf.mxu0
        %v486 = vadd.f32 0.0, %v485
        %487 = vmatmul.f32.gmra.mxu0 %v376
        %v488 = vpop.f32.mrf.mxu0
        %v489 = vadd.f32 0.0, %v488
        %490 = vmatmul.f32.gmra.mxu0 %v379
        %v491 = vpop.f32.mrf.mxu0
        %v492 = vadd.f32 0.0, %v491
        %493 = vdwg.mxu0
        %496 = vrot.lane.b32.xlu0 %v489, 112
        %v497 = vpop.permute.xlu0 %496
        %498 = vrot.lane.b32.xlu0 %v492, 112
        %v499 = vpop.permute.xlu0 %498
        %v502 = vsub.f32 %v483, %v497
        %v503 = vsub.f32 %v486, %v499
        %506 = vrot.lane.b32.xlu0 %v483, 112
        %v507 = vpop.permute.xlu0 %506
        %508 = vrot.lane.b32.xlu0 %v486, 112
        %v509 = vpop.permute.xlu0 %508
        %v512 = vadd.f32 %v489, %v507
        %v513 = vadd.f32 %v492, %v509
        %514 = vst.msk [vmem:[#allocation3] sm:$0xff] %vm339, %v502
        %515 = vst.msk [vmem:[#allocation3 + $0x8] sm:$0xff] %vm339, %v503
        %518 = vrot.lane.b32.xlu0 %v512, 16
        %v519 = vpop.permute.xlu0 %518
        %520 = vrot.lane.b32.xlu0 %v513, 16
        %v521 = vpop.permute.xlu0 %520
        %524 = vst.msk [vmem:[#allocation3] sm:$0xff] %vm460, %v519
        %525 = vst.msk [vmem:[#allocation3 + $0x8] sm:$0xff] %vm460, %v521
        %v526 = vld [vmem:[#allocation3] sm:$0xff]
        %v527 = vld [vmem:[#allocation3 + $0x8] sm:$0xff]
        %vm528 = vcmask 261120
        %v530 = vsel %vm528, %v526, 0
        %v533 = vsel %vm528, %v527, 0
        %535 = vmatpush.msra.mxu0 0.0
        %536 = vmatpush.msra.mxu0 0.0
        %537 = vmatpush.msra.mxu0 0.0
        %538 = vmatpush.msra.mxu0 0.0
        %539 = vmatpush.msra.mxu0 0.0
        %540 = vmatpush.msra.mxu0 0.0
        %541 = vmatpush.msra.mxu0 0.0
        %542 = vmatpush.msra.mxu0 0.0
        %543 = vmatpush.msra.mxu0 0.0
        %544 = vmatpush.msra.mxu0 0.0
        %545 = vmatpush.msra.mxu0 0.0
        %546 = vmatpush.msra.mxu0 0.0
        %547 = vmatpush.msra.mxu0 %v334
        %548 = vmatpush.msra.mxu0 %v333
        %549 = vmatpush.msra.mxu0 %v332
        %550 = vmatpush.msra.mxu0 %v331
        %551 = vmatmul.f32.gmra.mxu0 %v530
        %v552 = vpop.f32.mrf.mxu0
        %v553 = vadd.f32 0.0, %v552
        %554 = vmatmul.f32.gmra.mxu0 %v533
        %v555 = vpop.f32.mrf.mxu0
        %v556 = vadd.f32 0.0, %v555
        %557 = vdwg.mxu0
        %558 = vst.msk [vmem:[%s307] sm:$0xff] %vm339, %v553
        %559 = vst.msk [vmem:[%s307 + $0x8] sm:$0xff] %vm339, %v556
        %s560 = sand.u32 %s170, 1
        %s561 = scalar_lea.sflag [#allocation6], %s560
        %s562 = sand.u32 %s170, 1
        %s563 = smul.addr %s562, 16
        %s564 = scalar_lea.vmem [#allocation7], %s563
        %s565 = sand.u32 %s196, 1
        %s566 = scalar_lea.sflag [#allocation9], %s565
        %s567 = sand.u32 %s196, 1
        %s568 = smul.addr %s567, 16
        %s569 = scalar_lea.vmem [#allocation8], %s568
        // Predicated region
        $region49: #{tpu_custom_call.1} parent=43 // pred_check
          %p570 = pneg %p180
        $region50: #{tpu_custom_call.1} parent=43 // pred_check_branch
          %572 = sbr.rel (%p570) target = $region52
        $region51: #{tpu_custom_call.1} parent=43 // pred_region
          %574 = vsyncadd %s561, 0
          %s575 = smul.addr %s26, 2
          %s576 = smul.addr %s575, 8
          %s577 = scalar_lea.hbm %s6, %s576
          %s578 = sshll.u32 %s564, 4
          %s579 = int_to_ptr.vmem [resolvable:$true] %s578
          %s580 = sshll.u32 %s577, 4
          %s581 = int_to_ptr.hbm [resolvable:$true] %s580
          %586 = dma.vmem_to_hbm [thread:$0]  %s579, 256, %s581, %s561, 128, 128, 8
        $region52: #{tpu_custom_call.1} parent=43 // pred_fallthru
          _
        // Predicated region
        $region53: #{tpu_custom_call.1} parent=43 // pred_check
          %p587 = pneg %p206
        $region54: #{tpu_custom_call.1} parent=43 // pred_check_branch
          %589 = sbr.rel (%p587) target = $region56
        $region55: #{tpu_custom_call.1} parent=43 // pred_region
          %591 = vsyncadd %s566, 0
          %s592 = smul.addr %s26, 2
          %s593 = smul.addr %s592, 8
          %s594 = scalar_lea.hbm %s7, %s593
          %s595 = sshll.u32 %s569, 4
          %s596 = int_to_ptr.vmem [resolvable:$true] %s595
          %s597 = sshll.u32 %s594, 4
          %s598 = int_to_ptr.hbm [resolvable:$true] %s597
          %603 = dma.vmem_to_hbm [thread:$0]  %s596, 256, %s598, %s566, 128, 128, 8
        $region56: #{tpu_custom_call.1} parent=43 // pred_fallthru
          _
      $region44: #{tpu_custom_call.1} parent=5 // pred_fallthru
        _
      %p604 = scmp.le.s32.totalorder 2, %s21
      // Predicated region
      $region57: #{tpu_custom_call.1} parent=5 // pred_check
        %p605 = pneg %p604
      $region58: #{tpu_custom_call.1} parent=5 // pred_check_branch
        %607 = sbr.rel (%p605) target = $region60
      $region59: #{tpu_custom_call.1} parent=5 // pred_region
        %s608 = ssub.s32 %s21, 2
        // Predicated region
        $region61: #{tpu_custom_call.1} parent=59 // pred_check
          %p609 = pneg %p186
        $region62: #{tpu_custom_call.1} parent=59 // pred_check_branch
          %611 = sbr.rel (%p609) target = $region64
        $region63: #{tpu_custom_call.1} parent=59 // pred_region
          %s612 = sand.u32 %s171, 1
          %s613 = scalar_lea.sflag [#allocation6], %s612
          %s614 = sand.u32 %s171, 1
          %s615 = smul.addr %s614, 16
          %s616 = scalar_lea.vmem [#allocation7], %s615
          %618 = dma.done %s613, 256
        $region64: #{tpu_custom_call.1} parent=59 // pred_fallthru
          _
        // Predicated region
        $region65: #{tpu_custom_call.1} parent=59 // pred_check
          %p619 = pneg %p212
        $region66: #{tpu_custom_call.1} parent=59 // pred_check_branch
          %621 = sbr.rel (%p619) target = $region68
        $region67: #{tpu_custom_call.1} parent=59 // pred_region
          %s622 = sand.u32 %s197, 1
          %s623 = scalar_lea.sflag [#allocation9], %s622
          %s624 = sand.u32 %s197, 1
          %s625 = smul.addr %s624, 16
          %s626 = scalar_lea.vmem [#allocation8], %s625
          %628 = dma.done %s623, 256
        $region68: #{tpu_custom_call.1} parent=59 // pred_fallthru
          _
      $region60: #{tpu_custom_call.1} parent=5 // pred_fallthru
        _
    $region6: #{tpu_custom_call.1} parent=1 // loop_footer
      %s25 = sadd.s32 1, %s21
    $region7: #{tpu_custom_call.1} parent=1 // loop_footer_branch
      %20 = sbr.rel target = $region3
    $region8: #{tpu_custom_call.1} parent=1 // loop_exit
      _
    %629 = vsyncpa [#allocation5], 1
    %s630 = scalar_lea.sflag [#allocation5], 1
    %631 = vsyncpa %s630, 1
    %632 = vsyncpa [#allocation6], 1
    %s633 = scalar_lea.sflag [#allocation6], 1
    %634 = vsyncpa %s633, 1
    %635 = vsyncpa [#allocation9], 1
    %s636 = scalar_lea.sflag [#allocation9], 1
    %637 = vsyncpa %s636, 1

</llo_original>
